<compile_context>
chip_gen: v7x
topology: tpu7x:2x2x1
jax: 0.10.0
libtpu: 0.0.40
codegen_flags: <defaults>
</compile_context>

<pallas_src>
import functools
import math

import jax
import jax.numpy as jnp
from jax import lax
from jax.experimental import pallas as pl
from jax.experimental.pallas import tpu as pltpu


def _attention_kernel(x_ref, wbd_ref, mask_ref, o_ref):
    # x_ref:    VMEM (btg, Cg, Np) grouped, flattened inputs (native dtype)
    # wbd_ref:  VMEM (Cg, Cg) f32 block-diagonal (gamma * W_sn)
    # mask_ref: VMEM (Cg, Cg) f32 block-diagonal {0,1} within-batch mask
    # o_ref:    VMEM (btg, Cg, Np) output block
    x = x_ref[...]
    btg, cg, _ = x.shape

    # Per-group Gram matrices, contracting the lane axis N directly so no
    # (Np, Cg) transpose is materialized (both contraction axes are the last
    # axis -> maps straight onto the MXU).
    gram = jnp.einsum("bcn,bdn->bcd", x, x,
                      preferred_element_type=jnp.float32)       # (btg, Cg, Cg)

    # Keep only the within-batch C x C blocks, apply block-diag(gamma * W_sn)
    # as one 2-D matmul, then fold the residual by adding the identity:
    #   m' = gamma * (x x^T) W_sn + I   (per batch)
    gram = gram * mask_ref[...]
    m = jnp.dot(gram.reshape(btg * cg, cg), wbd_ref[...],
                preferred_element_type=jnp.float32).reshape(btg, cg, cg)
    m = m + jnp.eye(cg, dtype=jnp.float32)

    # out = m' @ x : the only remaining Cg x Cg x Np matmul; result goes from
    # the MXU accumulate straight to the output cast (no epilogue pass).
    o_ref[...] = jnp.einsum("bce,ben->bcn", m.astype(x.dtype), x,
                            preferred_element_type=jnp.float32
                            ).astype(o_ref.dtype)


def _vmem_capacity_bytes() -> int:
    """Physical VMEM per TensorCore (v5e/v6e: 128 MiB, v7x: 64 MiB)."""
    try:
        cap = int(pltpu.get_tpu_info().vmem_capacity_bytes)
        if cap > 0:
            return cap
    except Exception:
        pass
    return 64 * 1024 * 1024   # conservative fallback (v7x per-TC VMEM)


@functools.partial(jax.jit, static_argnames=("sym",))
def simple_self_attention(x, weight, gamma, *, sym=False):
    """x: (B, C, H, W); weight: (C, C, 1) conv1d weight (pre-spectral-norm);
    gamma: scalar. Returns (B, C, H, W)."""
    B, C, H, W = x.shape
    N = H * W
    dtype = x.dtype
    itemsize = jnp.dtype(dtype).itemsize

    # ---- spectral normalization (plain JAX glue, outside the kernel) ----
    w = weight.reshape(C, C)
    if sym:
        w = (w + w.T) / 2.0
    wf = w.astype(jnp.float32)

    def power_iter(_, v):
        v = wf.T @ (wf @ v)
        return v / (jnp.linalg.norm(v) + 1e-12)

    v0 = jnp.ones((C,), jnp.float32) / jnp.sqrt(C)
    v = lax.fori_loop(0, 32, power_iter, v0)
    sigma = jnp.linalg.norm(wf @ v)
    w_sn = wf / (sigma + 1e-12)

    # Fold gamma into the tiny weight; the residual is folded in-kernel as +I.
    w_eff = jnp.asarray(gamma, jnp.float32).reshape(()) * w_sn        # (C, C)

    # ---- layout: lane-pad N to 128, sublane-pack C by grouping batches ----
    Np = ((N + 127) // 128) * 128
    sub = max(8, 32 // itemsize)               # sublane multiple for dtype
    g = sub // math.gcd(C, sub)                # batches packed per group
    Cg = g * C                                 # sublane-dense group channels

    x2 = x.reshape(B, C, N)
    if Np != N:
        # Zero lane-padding does not change x x^T or W x; stripped at the end.
        x2 = jnp.pad(x2, ((0, 0), (0, 0), (0, Np - N)))

    # ---- tiling: groups per block sized from the per-chip VMEM capacity ----
    vmem_cap = _vmem_capacity_bytes()
    per_group_in = Cg * Np * itemsize
    # Resident per grid step: double-buffered in+out blocks, the f32 matmul
    # result before the output cast, plus small (Cg, Cg) f32 temporaries.
    resident_per_group = 4 * per_group_in + Cg * Np * 4 + 2 * Cg * Cg * 4
    budget = vmem_cap // 2
    btg = max(1, budget // max(resident_per_group, 1))

    n_groups = -(-B // g)                      # groups needed to cover B
    btg = min(btg, n_groups)
    if n_groups >= 2:
        # Keep at least two grid steps so ('parallel',) can split work across
        # the two TensorCores on v7x (no effect on single-TC v5e / v6e).
        btg = min(btg, -(-n_groups // 2))
    num_blocks = -(-n_groups // btg)
    n_groups_pad = num_blocks * btg
    B_pad = n_groups_pad * g

    if B_pad != B:
        # Zero batch-padding keeps every block full (no degenerate 1-batch
        # tiles); padded rows yield zeros (m' = I applied to zeros), stripped.
        x2 = jnp.pad(x2, ((0, B_pad - B), (0, 0), (0, 0)))
    xg = x2.reshape(n_groups_pad, Cg, Np)      # free reshape (contiguous)

    # Block-diagonal weight / mask recover the per-batch structure inside a
    # sublane-dense group (g == 1 makes both trivially (C, C) / all-ones).
    eye_g = jnp.eye(g, dtype=jnp.float32)
    w_bd = jnp.kron(eye_g, w_eff)                                   # (Cg, Cg)
    mask = jnp.kron(eye_g, jnp.ones((C, C), jnp.float32))           # (Cg, Cg)

    # Explicit VMEM budget, clamped strictly under the physical capacity.
    vmem_needed = (btg * resident_per_group
                   + 4 * Cg * Cg * 4           # double-buffered w_bd + mask
                   + 2 * btg * Cg * Cg * 4)    # gram / m f32 temps
    vmem_limit = int(min(vmem_cap * 9 // 10,
                         max(32 * 1024 * 1024, 2 * vmem_needed)))
    # TODO(synk): if a single group slab (Cg*Np) is too large for VMEM (huge
    # C*N on v7x's 64 MiB), switch to an N-tiled two-pass grid with a (Cg, Cg)
    # f32 accumulator for x x^T instead of one full (Cg, Np) slab per step.

    out = pl.pallas_call(
        _attention_kernel,
        out_shape=jax.ShapeDtypeStruct((n_groups_pad, Cg, Np), dtype),
        grid_spec=pltpu.PrefetchScalarGridSpec(
            num_scalar_prefetch=0,
            grid=(num_blocks,),
            in_specs=[
                pl.BlockSpec((btg, Cg, Np), lambda b: (b, 0, 0)),   # x groups
                pl.BlockSpec((Cg, Cg), lambda b: (0, 0)),           # gamma*W_sn
                pl.BlockSpec((Cg, Cg), lambda b: (0, 0)),           # mask
            ],
            out_specs=pl.BlockSpec((btg, Cg, Np), lambda b: (b, 0, 0)),
        ),
        compiler_params=pltpu.CompilerParams(
            dimension_semantics=("parallel",),
            vmem_limit_bytes=vmem_limit),
        # No input_output_aliases: the output is fully rewritten anyway, and
        # aliasing a non-donated input forces a defensive full copy of x2.
    )(xg, w_bd, mask)

    out = out.reshape(B_pad, C, Np)[:B, :, :N]
    return out.reshape(B, C, H, W)


def _reference(x, weight, gamma, *, sym=False):
    B, C, H, W = x.shape
    N = H * W
    w = weight.reshape(C, C)
    if sym:
        w = (w + w.T) / 2.0
    sigma = jnp.linalg.svd(w.astype(jnp.float32), compute_uv=False)[0]
    w_sn = w.astype(jnp.float32) / (sigma + 1e-12)
    x2 = x.reshape(B, C, N).astype(jnp.float32)
    convx = jnp.einsum("oc,bcn->bon", w_sn, x2)
    xxT = jnp.einsum("bcn,bdn->bcd", x2, x2)
    o = jnp.asarray(gamma, jnp.float32) * jnp.einsum("bcd,bdn->bcn", xxT, convx) + x2
    return o.reshape(B, C, H, W).astype(x.dtype)


if __name__ == "__main__":
    key = jax.random.PRNGKey(0)
    kx, kw, kg, kx2 = jax.random.split(key, 4)

    # Main case: n_in = 4, 16x16 feature map.
    B, C, H, W = 2, 4, 16, 16
    x = jax.random.normal(kx, (B, C, H, W), dtype=jnp.float32)

    # Conv1d(n_in, n_in, ks=1, bias=False) weight, Kaiming-normal init.
    fan_in = C * 1
    weight = jax.random.normal(kw, (C, C, 1), dtype=jnp.float32) * jnp.sqrt(
        2.0 / fan_in)

    gamma_zero = jnp.array(0.0, jnp.float32)   # module init value
    gamma_nz = jnp.array(0.37, jnp.float32)    # exercises the attention path

    out0 = simple_self_attention(x, weight, gamma_zero)
    out1 = simple_self_attention(x, weight, gamma_nz)
    jax.block_until_ready((out0, out1))

    ref0 = _reference(x, weight, gamma_zero)
    ref1 = _reference(x, weight, gamma_nz)
    assert out0.shape == (B, C, H, W)
    assert jnp.allclose(out0, ref0, atol=1e-4, rtol=1e-4)
    assert jnp.allclose(out1, ref1, atol=1e-3, rtol=1e-3)

    # Odd shapes: exercises lane padding (N=81 -> 128), batch padding and the
    # sublane batch-grouping path (B=3, g=2 -> padded to 4).
    B2, H2, W2 = 3, 9, 9
    x_odd = jax.random.normal(kx2, (B2, C, H2, W2), dtype=jnp.float32)
    out2 = simple_self_attention(x_odd, weight, gamma_nz)
    jax.block_until_ready(out2)
    ref2 = _reference(x_odd, weight, gamma_nz)
    assert out2.shape == (B2, C, H2, W2)
    assert jnp.allclose(out2, ref2, atol=1e-3, rtol=1e-3)

    print("KERNEL_OK")
</pallas_src>

<mosaic_0001>
module attributes {stable_mosaic.version = 11 : i64} {
  func.func @_attention_kernel(%arg0: i32, %arg1: memref<1x8x256xf32, #tpu.memory_space<vmem>>, %arg2: memref<8x8xf32, #tpu.memory_space<vmem>>, %arg3: memref<8x8xf32, #tpu.memory_space<vmem>>, %arg4: memref<1x8x256xf32, #tpu.memory_space<vmem>>) attributes {dimension_semantics = [#tpu.dimension_semantics<parallel>], iteration_bounds = array<i64: 1>, scalar_prefetch = 0 : i64, scratch_operands = 0 : i64, tpu.core_type = #tpu.core_type<tc>, window_params = [{transform_indices = @transform_0, window_bounds = array<i64: 1, 8, 256>}, {pipeline_mode = #tpu.pipeline_mode<synchronous>, transform_indices = @transform_1, window_bounds = array<i64: 8, 8>}, {pipeline_mode = #tpu.pipeline_mode<synchronous>, transform_indices = @transform_2, window_bounds = array<i64: 8, 8>}, {transform_indices = @transform_3, window_bounds = array<i64: 1, 8, 256>}]} {
    %c0 = arith.constant 0 : index
    %c0_0 = arith.constant 0 : index
    %c0_1 = arith.constant 0 : index
    %0 = vector.load %arg1[%c0, %c0_0, %c0_1] : memref<1x8x256xf32, #tpu.memory_space<vmem>>, vector<1x8x256xf32>
    "tpu.trace_start"() <{level = 10 : i32, message = "bcn,bdn->bcd"}> : () -> ()
    %cst = arith.constant dense<0.000000e+00> : vector<1x8x8xf32>
    %1 = tpu.matmul %0, %0, %cst {dimension_numbers = #tpu.dot_dimension_numbers<[2], [2], [1], [1], [0, 0, 0, 1, 1, 1], [0], [0]>} : vector<1x8x256xf32>, vector<1x8x256xf32>, vector<1x8x8xf32> -> vector<1x8x8xf32>
    "tpu.trace_stop"() : () -> ()
    %c0_2 = arith.constant 0 : index
    %c0_3 = arith.constant 0 : index
    %2 = vector.load %arg3[%c0_2, %c0_3] : memref<8x8xf32, #tpu.memory_space<vmem>>, vector<8x8xf32>
    %3 = vector.shape_cast %2 : vector<8x8xf32> to vector<1x8x8xf32>
    %4 = arith.mulf %1, %3 : vector<1x8x8xf32>
    %5 = vector.shape_cast %4 : vector<1x8x8xf32> to vector<8x8xf32>
    %c0_4 = arith.constant 0 : index
    %c0_5 = arith.constant 0 : index
    %6 = vector.load %arg2[%c0_4, %c0_5] : memref<8x8xf32, #tpu.memory_space<vmem>>, vector<8x8xf32>
    %cst_6 = arith.constant dense<0.000000e+00> : vector<8x8xf32>
    %7 = tpu.matmul %5, %6, %cst_6 {dimension_numbers = #tpu.dot_dimension_numbers<[1], [0], [0], [1], [0, 0, 1, 1], [], []>} : vector<8x8xf32>, vector<8x8xf32>, vector<8x8xf32> -> vector<8x8xf32>
    %8 = vector.shape_cast %7 : vector<8x8xf32> to vector<1x8x8xf32>
    %9 = tpu.iota {dimensions = array<i32: 0>} : vector<8x8xi32>
    %10 = tpu.iota {dimensions = array<i32: 1>} : vector<8x8xi32>
    %c0_i32 = arith.constant 0 : i32
    %11 = vector.broadcast %c0_i32 : i32 to vector<8x8xi32>
    %12 = arith.addi %9, %11 : vector<8x8xi32>
    %13 = arith.cmpi eq, %12, %10 : vector<8x8xi32>
    %14 = arith.extui %13 : vector<8x8xi1> to vector<8x8xi32>
    %15 = arith.sitofp %14 : vector<8x8xi32> to vector<8x8xf32>
    %16 = vector.shape_cast %15 : vector<8x8xf32> to vector<1x8x8xf32>
    %17 = arith.addf %8, %16 : vector<1x8x8xf32>
    "tpu.trace_start"() <{level = 10 : i32, message = "bce,ben->bcn"}> : () -> ()
    %cst_7 = arith.constant dense<0.000000e+00> : vector<1x8x256xf32>
    %18 = tpu.matmul %17, %0, %cst_7 {dimension_numbers = #tpu.dot_dimension_numbers<[2], [1], [1], [2], [0, 0, 0, 1, 1, 2], [0], [0]>} : vector<1x8x8xf32>, vector<1x8x256xf32>, vector<1x8x256xf32> -> vector<1x8x256xf32>
    "tpu.trace_stop"() : () -> ()
    %c0_8 = arith.constant 0 : index
    %c0_9 = arith.constant 0 : index
    %c0_10 = arith.constant 0 : index
    %19 = vector.load %arg4[%c0_8, %c0_9, %c0_10] : memref<1x8x256xf32, #tpu.memory_space<vmem>>, vector<1x8x256xf32>
    tpu.vector_store %arg4[%c0_8, %c0_9, %c0_10], %18 {strides = array<i32>} : memref<1x8x256xf32, #tpu.memory_space<vmem>>, vector<1x8x256xf32>,
    return
  }
  func.func @transform_0(%arg0: i32) -> (i32, i32, i32) {
    %c0_i32 = arith.constant 0 : i32
    %c0_i32_0 = arith.constant 0 : i32
    %c0_i32_1 = arith.constant 0 : i32
    return %arg0, %c0_i32, %c0_i32_0 : i32, i32, i32
  }
  func.func @transform_1(%arg0: i32) -> (i32, i32) {
    %c0_i32 = arith.constant 0 : i32
    %c0_i32_0 = arith.constant 0 : i32
    %c0_i32_1 = arith.constant 0 : i32
    return %c0_i32, %c0_i32_0 : i32, i32
  }
  func.func @transform_2(%arg0: i32) -> (i32, i32) {
    %c0_i32 = arith.constant 0 : i32
    %c0_i32_0 = arith.constant 0 : i32
    %c0_i32_1 = arith.constant 0 : i32
    return %c0_i32, %c0_i32_0 : i32, i32
  }
  func.func @transform_3(%arg0: i32) -> (i32, i32, i32) {
    %c0_i32 = arith.constant 0 : i32
    %c0_i32_0 = arith.constant 0 : i32
    %c0_i32_1 = arith.constant 0 : i32
    return %arg0, %c0_i32, %c0_i32_0 : i32, i32, i32
  }
}

</mosaic_0001>

<llo_original>
// kernel: custom-call
$region0: #{custom-call}
  %s0 = inlined_call_operand.vmem [shape: f32[4], index: 0, kind: output, shape index: {}]

// kernel: mul.28
$region0: #{mul.28}
  #allocation0 [shape = 's32[1]{0}', space=sflag, size = 0x4, scoped, tag = 'scoped memory for mul.28']
  %s0 = inlined_call_operand.vmem [shape: f32[8,8], index: 0, kind: input, shape index: {}]
  %s1 = inlined_call_operand.vmem [shape: f32[8,8], index: 1, kind: input, shape index: {}]
  %s2 = inlined_call_operand.vmem [shape: f32[8,8], index: 2, kind: output, shape index: {}]
  %v3 = vld [vmem:[%s0] sm:$0xff]
  %v4 = vld [vmem:[%s1] sm:$0xff]
  %5 = xla_tuple %v3, %v4
  %6 = xla_tuple %5
  %v7 = vmul.f32 %v3, %v4
  %8 = xla_tuple %v7
  %9 = vst [vmem:[%s2] sm:$0xff] %v7

// kernel: simple_self_attention.1
$region0: #{simple_self_attention.1}
  #allocation0 [shape = 'u32[]', space=smem, size = 0x4, offset = 0x4, fixed_abs, tag = 'smem constant byte address 0x4 - core index']
  #allocation1 [shape = 'u32[144,128]{1,0:T(1,128)}', space=vmem, size = 0x12000, scoped, tag = 'internal scratch']
  %s0 = inlined_call_operand.vmem [shape: f32[1,8,256], index: 0, kind: input, shape index: {}]
  %s1 = inlined_call_operand.vmem [shape: f32[8,8], index: 1, kind: input, shape index: {}]
  %s2 = inlined_call_operand.vmem [shape: f32[8,8], index: 2, kind: input, shape index: {}]
  %s3 = inlined_call_operand.vmem [shape: f32[1,8,256], index: 3, kind: output, shape index: {}]
  %s4 = sld [smem:[#allocation0]]
  $region22: #{simple_self_attention.1} parent=0
    _
  %s6 = ssub.s32 1, %s4
  %s7 = scalar_select 0, %s6, %s4
  // Predicated region
  $region2: #{simple_self_attention.1} parent=0 // pred_check
    _
  $region3: #{simple_self_attention.1} parent=0 // pred_check_branch
    %9 = sbr.rel (0) target = $region5
  $region4: #{simple_self_attention.1} parent=0 // pred_region
    _
  $region5: #{simple_self_attention.1} parent=0 // pred_fallthru
    _
  // Predicated region
  $region6: #{simple_self_attention.1} parent=0 // pred_check
    _
  $region7: #{simple_self_attention.1} parent=0 // pred_check_branch
    %11 = sbr.rel (0) target = $region9
  $region8: #{simple_self_attention.1} parent=0 // pred_region
    _
  $region9: #{simple_self_attention.1} parent=0 // pred_fallthru
    _
  // Predicated region
  $region10: #{simple_self_attention.1} parent=0 // pred_check
    _
  $region11: #{simple_self_attention.1} parent=0 // pred_check_branch
    %13 = sbr.rel (0) target = $region13
  $region12: #{simple_self_attention.1} parent=0 // pred_region
    _
  $region13: #{simple_self_attention.1} parent=0 // pred_fallthru
    _
  %v14 = vld [vmem:[%s0] sm:$0xff]
  %v15 = vld [vmem:[%s0 + $0x8] sm:$0xff]
  %16 = vmatprep.subr.mxu0 %v15
  %17 = vmatpush1.xpose.msra.mxu0 %v14
  %18 = vmatprep.subr.mxu0 0.0
  %19 = vmatpush1.xpose.msra.mxu0 0.0
  %20 = vmatprep.subr.mxu0 0.0
  %21 = vmatpush1.xpose.msra.mxu0 0.0
  %22 = vmatprep.subr.mxu0 0.0
  %23 = vmatpush1.xpose.msra.mxu0 0.0
  %24 = vmatprep.subr.mxu0 0.0
  %25 = vmatpush1.xpose.msra.mxu0 0.0
  %26 = vmatprep.subr.mxu0 0.0
  %27 = vmatpush1.xpose.msra.mxu0 0.0
  %28 = vmatprep.subr.mxu0 0.0
  %29 = vmatpush1.xpose.msra.mxu0 0.0
  %30 = vmatprep.subr.mxu0 0.0
  %31 = vmatpush1.xpose.msra.mxu0 0.0
  %32 = vmatprep.subr.mxu0 0.0
  %33 = vmatpush1.xpose.msra.mxu0 0.0
  %34 = vmatprep.subr.mxu0 0.0
  %35 = vmatpush1.xpose.msra.mxu0 0.0
  %36 = vmatprep.subr.mxu0 0.0
  %37 = vmatpush1.xpose.msra.mxu0 0.0
  %38 = vmatprep.subr.mxu0 0.0
  %39 = vmatpush1.xpose.msra.mxu0 0.0
  %40 = vmatprep.subr.mxu0 0.0
  %41 = vmatpush1.xpose.msra.mxu0 0.0
  %42 = vmatprep.subr.mxu0 0.0
  %43 = vmatpush1.xpose.msra.mxu0 0.0
  %44 = vmatprep.subr.mxu0 0.0
  %45 = vmatpush1.xpose.msra.mxu0 0.0
  %46 = vmatprep.subr.mxu0 0.0
  %47 = vmatpush1.xpose.msra.mxu0 0.0
  %48 = vmatprep.subr.mxu0 0.0
  %49 = vmatpush1.xpose.msra.mxu0 0.0
  %50 = vmatprep.subr.mxu0 0.0
  %51 = vmatpush1.xpose.msra.mxu0 0.0
  %52 = vmatprep.subr.mxu0 0.0
  %53 = vmatpush1.xpose.msra.mxu0 0.0
  %54 = vmatprep.subr.mxu0 0.0
  %55 = vmatpush1.xpose.msra.mxu0 0.0
  %56 = vmatprep.subr.mxu0 0.0
  %57 = vmatpush1.xpose.msra.mxu0 0.0
  %58 = vmatprep.subr.mxu0 0.0
  %59 = vmatpush1.xpose.msra.mxu0 0.0
  %60 = vmatprep.subr.mxu0 0.0
  %61 = vmatpush1.xpose.msra.mxu0 0.0
  %62 = vmatprep.subr.mxu0 0.0
  %63 = vmatpush1.xpose.msra.mxu0 0.0
  %64 = vmatprep.subr.mxu0 0.0
  %65 = vmatpush1.xpose.msra.mxu0 0.0
  %66 = vmatprep.subr.mxu0 0.0
  %67 = vmatpush1.xpose.msra.mxu0 0.0
  %68 = vmatprep.subr.mxu0 0.0
  %69 = vmatpush1.xpose.msra.mxu0 0.0
  %70 = vmatprep.subr.mxu0 0.0
  %71 = vmatpush1.xpose.msra.mxu0 0.0
  %72 = vmatprep.subr.mxu0 0.0
  %73 = vmatpush1.xpose.msra.mxu0 0.0
  %74 = vmatprep.subr.mxu0 0.0
  %75 = vmatpush1.xpose.msra.mxu0 0.0
  %76 = vmatprep.subr.mxu0 0.0
  %77 = vmatpush1.xpose.msra.mxu0 0.0
  %78 = vmatprep.subr.mxu0 0.0
  %79 = vmatpush1.xpose.msra.mxu0 0.0
  %80 = vmatprep.mubr.f32.mxu0 %v15
  %81 = vmatmul.mubr.f32.gmra.mrb[0].mxu0 %v14
  %v82 = vpop.f32.mrb[0].mxu0
  %v83 = vadd.f32 0.0, %v82
  %v84 = vpop.f32.mrb[0].mxu0
  %85 = vdwg.mxu0
  %v86 = vld [vmem:[%s2] sm:$0xff]
  %v87 = vmul.f32 %v83, %v86
  %v88 = vld [vmem:[%s1] sm:$0xff]
  %vm89 = vcmask 64512
  %v91 = vsel %vm89, %v87, 0
  %93 = vmatprep.subr.mxu0 0.0
  %94 = vmatpush1.msra.mxu0 %v88
  %95 = vmatprep.subr.mxu0 0.0
  %96 = vmatpush1.msra.mxu0 0.0
  %97 = vmatprep.subr.mxu0 0.0
  %98 = vmatpush1.msra.mxu0 0.0
  %99 = vmatprep.subr.mxu0 0.0
  %100 = vmatpush1.msra.mxu0 0.0
  %101 = vmatprep.subr.mxu0 0.0
  %102 = vmatpush1.msra.mxu0 0.0
  %103 = vmatprep.subr.mxu0 0.0
  %104 = vmatpush1.msra.mxu0 0.0
  %105 = vmatprep.subr.mxu0 0.0
  %106 = vmatpush1.msra.mxu0 0.0
  %107 = vmatprep.subr.mxu0 0.0
  %108 = vmatpush1.msra.mxu0 0.0
  %109 = vmatprep.subr.mxu0 0.0
  %110 = vmatpush1.msra.mxu0 0.0
  %111 = vmatprep.subr.mxu0 0.0
  %112 = vmatpush1.msra.mxu0 0.0
  %113 = vmatprep.subr.mxu0 0.0
  %114 = vmatpush1.msra.mxu0 0.0
  %115 = vmatprep.subr.mxu0 0.0
  %116 = vmatpush1.msra.mxu0 0.0
  %117 = vmatprep.subr.mxu0 0.0
  %118 = vmatpush1.msra.mxu0 0.0
  %119 = vmatprep.subr.mxu0 0.0
  %120 = vmatpush1.msra.mxu0 0.0
  %121 = vmatprep.subr.mxu0 0.0
  %122 = vmatpush1.msra.mxu0 0.0
  %123 = vmatprep.subr.mxu0 0.0
  %124 = vmatpush1.msra.mxu0 0.0
  %125 = vmatprep.subr.mxu0 0.0
  %126 = vmatpush1.msra.mxu0 0.0
  %127 = vmatprep.subr.mxu0 0.0
  %128 = vmatpush1.msra.mxu0 0.0
  %129 = vmatprep.subr.mxu0 0.0
  %130 = vmatpush1.msra.mxu0 0.0
  %131 = vmatprep.subr.mxu0 0.0
  %132 = vmatpush1.msra.mxu0 0.0
  %133 = vmatprep.subr.mxu0 0.0
  %134 = vmatpush1.msra.mxu0 0.0
  %135 = vmatprep.subr.mxu0 0.0
  %136 = vmatpush1.msra.mxu0 0.0
  %137 = vmatprep.subr.mxu0 0.0
  %138 = vmatpush1.msra.mxu0 0.0
  %139 = vmatprep.subr.mxu0 0.0
  %140 = vmatpush1.msra.mxu0 0.0
  %141 = vmatprep.subr.mxu0 0.0
  %142 = vmatpush1.msra.mxu0 0.0
  %143 = vmatprep.subr.mxu0 0.0
  %144 = vmatpush1.msra.mxu0 0.0
  %145 = vmatprep.subr.mxu0 0.0
  %146 = vmatpush1.msra.mxu0 0.0
  %147 = vmatprep.subr.mxu0 0.0
  %148 = vmatpush1.msra.mxu0 0.0
  %149 = vmatprep.subr.mxu0 0.0
  %150 = vmatpush1.msra.mxu0 0.0
  %151 = vmatprep.subr.mxu0 0.0
  %152 = vmatpush1.msra.mxu0 0.0
  %153 = vmatprep.subr.mxu0 0.0
  %154 = vmatpush1.msra.mxu0 0.0
  %155 = vmatprep.subr.mxu0 0.0
  %156 = vmatpush1.msra.mxu0 0.0
  %157 = vmatprep.mubr.f32.mxu0 0.0
  %158 = vmatmul.mubr.f32.gmra.mrb[0].mxu0 %v91
  %v159 = vpop.f32.mrb[0].mxu0
  %v160 = vadd.f32 0.0, %v159
  %v161 = vpop.f32.mrb[0].mxu0
  %162 = vdwg.mxu0
  %v163 = vlaneseq
  %v164 = vshrl.u32 %v163, 7
  %v165 = vlaneseq
  %v166 = vand.u32 %v165, 127
  %vm167 = vcmp.eq.s32.totalorder %v164, %v166
  %v168 = vsel %vm167, 1, 0
  %v169 = vcvt.s32.f32 %v168
  %v170 = vadd.f32 %v160, %v169
  %v172 = vsel %vm89, %v170, 0
  %174 = vmatprep.subr.mxu0 %v15
  %175 = vmatpush1.msra.mxu0 %v14
  %176 = vmatprep.subr.mxu0 0.0
  %177 = vmatpush1.msra.mxu0 0.0
  %178 = vmatprep.subr.mxu0 0.0
  %179 = vmatpush1.msra.mxu0 0.0
  %180 = vmatprep.subr.mxu0 0.0
  %181 = vmatpush1.msra.mxu0 0.0
  %182 = vmatprep.subr.mxu0 0.0
  %183 = vmatpush1.msra.mxu0 0.0
  %184 = vmatprep.subr.mxu0 0.0
  %185 = vmatpush1.msra.mxu0 0.0
  %186 = vmatprep.subr.mxu0 0.0
  %187 = vmatpush1.msra.mxu0 0.0
  %188 = vmatprep.subr.mxu0 0.0
  %189 = vmatpush1.msra.mxu0 0.0
  %190 = vmatprep.subr.mxu0 0.0
  %191 = vmatpush1.msra.mxu0 0.0
  %192 = vmatprep.subr.mxu0 0.0
  %193 = vmatpush1.msra.mxu0 0.0
  %194 = vmatprep.subr.mxu0 0.0
  %195 = vmatpush1.msra.mxu0 0.0
  %196 = vmatprep.subr.mxu0 0.0
  %197 = vmatpush1.msra.mxu0 0.0
  %198 = vmatprep.subr.mxu0 0.0
  %199 = vmatpush1.msra.mxu0 0.0
  %200 = vmatprep.subr.mxu0 0.0
  %201 = vmatpush1.msra.mxu0 0.0
  %202 = vmatprep.subr.mxu0 0.0
  %203 = vmatpush1.msra.mxu0 0.0
  %204 = vmatprep.subr.mxu0 0.0
  %205 = vmatpush1.msra.mxu0 0.0
  %206 = vmatprep.subr.mxu0 0.0
  %207 = vmatpush1.msra.mxu0 0.0
  %208 = vmatprep.subr.mxu0 0.0
  %209 = vmatpush1.msra.mxu0 0.0
  %210 = vmatprep.subr.mxu0 0.0
  %211 = vmatpush1.msra.mxu0 0.0
  %212 = vmatprep.subr.mxu0 0.0
  %213 = vmatpush1.msra.mxu0 0.0
  %214 = vmatprep.subr.mxu0 0.0
  %215 = vmatpush1.msra.mxu0 0.0
  %216 = vmatprep.subr.mxu0 0.0
  %217 = vmatpush1.msra.mxu0 0.0
  %218 = vmatprep.subr.mxu0 0.0
  %219 = vmatpush1.msra.mxu0 0.0
  %220 = vmatprep.subr.mxu0 0.0
  %221 = vmatpush1.msra.mxu0 0.0
  %222 = vmatprep.subr.mxu0 0.0
  %223 = vmatpush1.msra.mxu0 0.0
  %224 = vmatprep.subr.mxu0 0.0
  %225 = vmatpush1.msra.mxu0 0.0
  %226 = vmatprep.subr.mxu0 0.0
  %227 = vmatpush1.msra.mxu0 0.0
  %228 = vmatprep.subr.mxu0 0.0
  %229 = vmatpush1.msra.mxu0 0.0
  %230 = vmatprep.subr.mxu0 0.0
  %231 = vmatpush1.msra.mxu0 0.0
  %232 = vmatprep.subr.mxu0 0.0
  %233 = vmatpush1.msra.mxu0 0.0
  %234 = vmatprep.subr.mxu0 0.0
  %235 = vmatpush1.msra.mxu0 0.0
  %236 = vmatprep.subr.mxu0 0.0
  %237 = vmatpush1.msra.mxu0 0.0
  %238 = vmatprep.mubr.f32.mxu0 0.0
  %239 = vmatmul.mubr.f32.gmra.mrb[0].mxu0 %v172
  %v240 = vpop.f32.mrb[0].mxu0
  %v241 = vadd.f32 0.0, %v240
  %v242 = vpop.f32.mrb[0].mxu0
  %v243 = vadd.f32 0.0, %v242
  %244 = vdwg.mxu0
  %245 = vst [vmem:[%s3] sm:$0xff] %v241
  %246 = vst [vmem:[%s3 + $0x8] sm:$0xff] %v243
  // Predicated region
  $region14: #{simple_self_attention.1} parent=0 // pred_check
    _
  $region15: #{simple_self_attention.1} parent=0 // pred_check_branch
    %248 = sbr.rel (0) target = $region17
  $region16: #{simple_self_attention.1} parent=0 // pred_region
    _
  $region17: #{simple_self_attention.1} parent=0 // pred_fallthru
    _
  // Predicated region
  $region18: #{simple_self_attention.1} parent=0 // pred_check
    _
  $region19: #{simple_self_attention.1} parent=0 // pred_check_branch
    %250 = sbr.rel (0) target = $region21
  $region20: #{simple_self_attention.1} parent=0 // pred_region
    _
  $region21: #{simple_self_attention.1} parent=0 // pred_fallthru
    _

</llo_original>
